<compile_context>
chip_gen: v7x
topology: tpu7x:2x2x1
jax: 0.10.0
libtpu: 0.0.40
codegen_flags: <defaults>
</compile_context>

<pallas_src>
import jax
import jax.numpy as jnp
from jax.experimental import pallas as pl
from jax.experimental.pallas import tpu as pltpu


# ---------------- Pallas kernel ----------------

def _copy_kernel(x_ref, o_ref):
    # x_ref / o_ref: (TILE_M, LANE) VMEM tiles -- pure pass-through.
    o_ref[...] = x_ref[...]


# ---------------- tiling heuristics ----------------

def _pick_lane(F):
    """Largest power-of-two multiple of 128 (<= 4096) dividing F, else F."""
    for cand in (4096, 2048, 1024, 512, 256, 128):
        if F % cand == 0:
            return cand
    return F  # fallback: full feature extent (full-array-dim block is legal)


def _pick_tile_m(M, lane, itemsize):
    """Largest multiple-of-8 divisor of M whose block stays ~<=2 MiB, else M."""
    budget = 2 << 20
    for t in (1024, 512, 256, 128, 64, 32, 16, 8):
        if M % t == 0 and t * lane * itemsize <= budget:
            return t
    return M


# ---------------- wrapper ----------------

def reshape_anchors_regression(x, num_anchors=9):
    """(N, 4*num_anchors, W, H) -> (N, 4, num_anchors, W, H).

    Matches PyTorch `x.contiguous().view(N, 4, num_anchors, W, H)` exactly
    (row-major reinterpretation of the same bytes).
    """
    N, C, W, H = x.shape
    assert C == 4 * num_anchors, (C, num_anchors)

    F = C * W * H                       # flat features per batch element
    lane = _pick_lane(F)                # lane-dense trailing dim
    M = N * (F // lane)                 # rows of the 2-D view
    tile_m = _pick_tile_m(M, lane, x.dtype.itemsize)

    x2 = x.reshape(M, lane)             # metadata-only (contiguous input)

    out2 = pl.pallas_call(
        _copy_kernel,
        out_shape=jax.ShapeDtypeStruct((M, lane), x.dtype),
        grid=(M // tile_m,),
        in_specs=[pl.BlockSpec((tile_m, lane), lambda i: (i, 0))],
        out_specs=pl.BlockSpec((tile_m, lane), lambda i: (i, 0)),
        compiler_params=pltpu.CompilerParams(
            dimension_semantics=("parallel",)),
    )(x2)

    return out2.reshape(N, 4, num_anchors, W, H)  # metadata-only


# ---------------- self-test ----------------

if __name__ == "__main__":
    key = jax.random.PRNGKey(0)

    num_anchors = 9
    N, W, H = 2, 16, 16
    C = 4 * num_anchors                  # 36 channels

    x = jax.random.normal(key, (N, C, W, H), jnp.float32)

    out = reshape_anchors_regression(x, num_anchors=num_anchors)
    out = jax.block_until_ready(out)

    ref = x.reshape(N, 4, num_anchors, W, H)
    assert out.shape == (N, 4, num_anchors, W, H), out.shape
    assert out.dtype == x.dtype
    assert bool(jnp.array_equal(out, ref))
    assert bool(jnp.all(jnp.isfinite(out)))

    print("KERNEL_OK")
</pallas_src>

<mosaic_0001>
module attributes {stable_mosaic.version = 11 : i64} {
  func.func @_copy_kernel(%arg0: i32, %arg1: memref<18x1024xf32, #tpu.memory_space<vmem>>, %arg2: memref<18x1024xf32, #tpu.memory_space<vmem>>) attributes {dimension_semantics = [#tpu.dimension_semantics<parallel>], iteration_bounds = array<i64: 1>, scalar_prefetch = 0 : i64, scratch_operands = 0 : i64, tpu.core_type = #tpu.core_type<tc>, window_params = [{transform_indices = @transform_0, window_bounds = array<i64: 18, 1024>}, {transform_indices = @transform_1, window_bounds = array<i64: 18, 1024>}]} {
    %c0 = arith.constant 0 : index
    %c0_0 = arith.constant 0 : index
    %0 = vector.load %arg1[%c0, %c0_0] : memref<18x1024xf32, #tpu.memory_space<vmem>>, vector<18x1024xf32>
    %c0_1 = arith.constant 0 : index
    %c0_2 = arith.constant 0 : index
    %1 = vector.load %arg2[%c0_1, %c0_2] : memref<18x1024xf32, #tpu.memory_space<vmem>>, vector<18x1024xf32>
    tpu.vector_store %arg2[%c0_1, %c0_2], %0 {strides = array<i32>} : memref<18x1024xf32, #tpu.memory_space<vmem>>, vector<18x1024xf32>,
    return
  }
  func.func @transform_0(%arg0: i32) -> (i32, i32) {
    %c0_i32 = arith.constant 0 : i32
    %c0_i32_0 = arith.constant 0 : i32
    return %arg0, %c0_i32 : i32, i32
  }
  func.func @transform_1(%arg0: i32) -> (i32, i32) {
    %c0_i32 = arith.constant 0 : i32
    %c0_i32_0 = arith.constant 0 : i32
    return %arg0, %c0_i32 : i32, i32
  }
}

</mosaic_0001>

<llo_original>
// kernel: tpu_custom_call.1
$region0: #{tpu_custom_call.1}
  #allocation0 [shape = 'u32[]', space=smem, size = 0x4, offset = 0x4, fixed_abs, tag = 'smem constant byte address 0x4 - core index']
  #allocation1 [shape = 'u32[144,128]{1,0:T(1,128)}', space=vmem, size = 0x12000, scoped, tag = 'internal scratch']
  %s0 = inlined_call_operand.hbm [shape: f32[18,1024], index: 0, kind: input, shape index: {}]
  %s1 = inlined_call_operand.hbm [shape: f32[18,1024], index: 1, kind: output, shape index: {}]
  %s2 = sld [smem:[#allocation0]]
  $region18: #{tpu_custom_call.1} parent=0
    _
  %s4 = ssub.s32 1, %s2
  %s5 = scalar_select 0, %s4, %s2
  $region1: #{tpu_custom_call.1} parent=0
    #allocation2 [shape = 'u8[98304]{0}', space=vmem, size = 0x18000, scoped, tag = 'input window, operand 0, single buffered']
    #allocation3 [shape = 's32[1]{0}', space=sflag, size = 0x4, scoped, tag = 'scoped memory for tpu_custom_call.1']
    #allocation4 [shape = 's32[1]{0}', space=sflag, size = 0x4, scoped, tag = 'scoped memory for tpu_custom_call.1']
    #allocation5 [shape = 'u8[98304]{0}', space=vmem, size = 0x18000, scoped, tag = 'output window, operand 0, single buffered']
    %6 = vsyncpa [#allocation3], 0
    %7 = vsyncpa [#allocation4], 0
    // Predicated region
    $region2: #{tpu_custom_call.1} parent=1 // pred_check
      _
    $region3: #{tpu_custom_call.1} parent=1 // pred_check_branch
      %9 = sbr.rel (0) target = $region5
    $region4: #{tpu_custom_call.1} parent=1 // pred_region
      %s11 = ssub.s32 3072, 3072
      %12 = vsyncadd [#allocation3], %s11
      %s13 = sshll.u32 [#allocation2], 4
      %s14 = int_to_ptr.vmem [resolvable:$true] %s13
      %19 = dma.hbm_to_vmem [thread:$0]  %s0, 3072, %s14, [#allocation3], 1024, 1024, 64
    $region5: #{tpu_custom_call.1} parent=1 // pred_fallthru
      _
    // Predicated region
    $region6: #{tpu_custom_call.1} parent=1 // pred_check
      _
    $region7: #{tpu_custom_call.1} parent=1 // pred_check_branch
      %21 = sbr.rel (0) target = $region9
    $region8: #{tpu_custom_call.1} parent=1 // pred_region
      %22 = dma.done [#allocation3], 3072
    $region9: #{tpu_custom_call.1} parent=1 // pred_fallthru
      _
    %v23 = vld [vmem:[#allocation2] sm:$0xff]
    %v24 = vld [vmem:[#allocation2 + $0x8] sm:$0xff]
    %v25 = vld [vmem:[#allocation2 + $0x10] sm:$0xff]
    %v26 = vld [vmem:[#allocation2 + $0x18] sm:$0xff]
    %v27 = vld [vmem:[#allocation2 + $0x20] sm:$0xff]
    %v28 = vld [vmem:[#allocation2 + $0x28] sm:$0xff]
    %v29 = vld [vmem:[#allocation2 + $0x30] sm:$0xff]
    %v30 = vld [vmem:[#allocation2 + $0x38] sm:$0xff]
    %v31 = vld [vmem:[#allocation2 + $0x40] sm:$0xff]
    %v32 = vld [vmem:[#allocation2 + $0x48] sm:$0xff]
    %v33 = vld [vmem:[#allocation2 + $0x50] sm:$0xff]
    %v34 = vld [vmem:[#allocation2 + $0x58] sm:$0xff]
    %v35 = vld [vmem:[#allocation2 + $0x60] sm:$0xff]
    %v36 = vld [vmem:[#allocation2 + $0x68] sm:$0xff]
    %v37 = vld [vmem:[#allocation2 + $0x70] sm:$0xff]
    %v38 = vld [vmem:[#allocation2 + $0x78] sm:$0xff]
    %v39 = vld [vmem:[#allocation2 + $0x80] sm:$0x3]
    %v40 = vld [vmem:[#allocation2 + $0x88] sm:$0x3]
    %v41 = vld [vmem:[#allocation2 + $0x90] sm:$0x3]
    %v42 = vld [vmem:[#allocation2 + $0x98] sm:$0x3]
    %v43 = vld [vmem:[#allocation2 + $0xa0] sm:$0x3]
    %v44 = vld [vmem:[#allocation2 + $0xa8] sm:$0x3]
    %v45 = vld [vmem:[#allocation2 + $0xb0] sm:$0x3]
    %v46 = vld [vmem:[#allocation2 + $0xb8] sm:$0x3]
    %47 = vst [vmem:[#allocation5] sm:$0xff] %v23
    %48 = vst [vmem:[#allocation5 + $0x8] sm:$0xff] %v24
    %49 = vst [vmem:[#allocation5 + $0x10] sm:$0xff] %v25
    %50 = vst [vmem:[#allocation5 + $0x18] sm:$0xff] %v26
    %51 = vst [vmem:[#allocation5 + $0x20] sm:$0xff] %v27
    %52 = vst [vmem:[#allocation5 + $0x28] sm:$0xff] %v28
    %53 = vst [vmem:[#allocation5 + $0x30] sm:$0xff] %v29
    %54 = vst [vmem:[#allocation5 + $0x38] sm:$0xff] %v30
    %55 = vst [vmem:[#allocation5 + $0x40] sm:$0xff] %v31
    %56 = vst [vmem:[#allocation5 + $0x48] sm:$0xff] %v32
    %57 = vst [vmem:[#allocation5 + $0x50] sm:$0xff] %v33
    %58 = vst [vmem:[#allocation5 + $0x58] sm:$0xff] %v34
    %59 = vst [vmem:[#allocation5 + $0x60] sm:$0xff] %v35
    %60 = vst [vmem:[#allocation5 + $0x68] sm:$0xff] %v36
    %61 = vst [vmem:[#allocation5 + $0x70] sm:$0xff] %v37
    %62 = vst [vmem:[#allocation5 + $0x78] sm:$0xff] %v38
    %63 = vst [vmem:[#allocation5 + $0x80] sm:$0x3] %v39
    %64 = vst [vmem:[#allocation5 + $0x88] sm:$0x3] %v40
    %65 = vst [vmem:[#allocation5 + $0x90] sm:$0x3] %v41
    %66 = vst [vmem:[#allocation5 + $0x98] sm:$0x3] %v42
    %67 = vst [vmem:[#allocation5 + $0xa0] sm:$0x3] %v43
    %68 = vst [vmem:[#allocation5 + $0xa8] sm:$0x3] %v44
    %69 = vst [vmem:[#allocation5 + $0xb0] sm:$0x3] %v45
    %70 = vst [vmem:[#allocation5 + $0xb8] sm:$0x3] %v46
    // Predicated region
    $region10: #{tpu_custom_call.1} parent=1 // pred_check
      _
    $region11: #{tpu_custom_call.1} parent=1 // pred_check_branch
      %72 = sbr.rel (0) target = $region13
    $region12: #{tpu_custom_call.1} parent=1 // pred_region
      %s74 = ssub.s32 3072, 3072
      %75 = vsyncadd [#allocation4], %s74
      %s76 = sshll.u32 [#allocation5], 4
      %s77 = int_to_ptr.vmem [resolvable:$true] %s76
      %82 = dma.vmem_to_hbm [thread:$0]  %s77, 3072, %s1, [#allocation4], 1024, 1024, 64
    $region13: #{tpu_custom_call.1} parent=1 // pred_fallthru
      _
    // Predicated region
    $region14: #{tpu_custom_call.1} parent=1 // pred_check
      _
    $region15: #{tpu_custom_call.1} parent=1 // pred_check_branch
      %84 = sbr.rel (0) target = $region17
    $region16: #{tpu_custom_call.1} parent=1 // pred_region
      %85 = dma.done [#allocation4], 3072
    $region17: #{tpu_custom_call.1} parent=1 // pred_fallthru
      _
    %86 = vsyncpa [#allocation3], 1
    %87 = vsyncpa [#allocation4], 1

</llo_original>
